<compile_context>
chip_gen: v5e
topology: v5e:2x2
jax: 0.10.0
libtpu: 0.0.40
codegen_flags: <defaults>
</compile_context>

<pallas_src>
import functools

import jax
import jax.numpy as jnp
from jax.experimental import pallas as pl
from jax.experimental.pallas import tpu as pltpu


def _round_up(x, m):
    return ((x + m - 1) // m) * m


def _cdiv(a, b):
    return (a + b - 1) // b


def _pick_tile(dim, align, max_tile):
    """Tile <= ~max_tile covering `dim` in cdiv(dim, max_tile) steps, rounded
    up to `align`, so padding never exceeds one alignment unit per tile."""
    nt = _cdiv(max(dim, 1), max_tile)
    return _round_up(_cdiv(dim, nt), align)


def _vmem_limit_bytes(working_set_bytes):
    """Per-generation VMEM budget: ~75% of physical (96 MiB on v5e/v6e's
    128 MiB, 48 MiB on v7x's 64 MiB); fall back to the v7x-safe value."""
    try:
        cap = int(pltpu.get_tpu_info().vmem_capacity_bytes)
    except Exception:
        cap = 64 << 20
    return int(min(max(working_set_bytes + (16 << 20), 32 << 20), (cap * 3) // 4))


# ---------------------------------------------------------------------------
# Kernels (operands arrive already in the MXU dtype; no in-kernel casts).
# ---------------------------------------------------------------------------

def _linear_relu_kernel_single_k(x_ref, w_ref, b_ref, o_ref):
    # Single K step: no accumulator scratch needed.
    y = jnp.dot(x_ref[...], w_ref[...], preferred_element_type=jnp.float32)
    y = y + b_ref[...].astype(jnp.float32)          # broadcast [1, tn]
    o_ref[...] = jnp.maximum(y, 0.0).astype(o_ref.dtype)


def _linear_relu_kernel_multi_k(x_ref, w_ref, b_ref, o_ref, acc_ref):
    # grid = (M//tm, N//tn, K//tk); K is the reduction axis (last, "arbitrary").
    @pl.when(pl.program_id(2) == 0)
    def _():
        acc_ref[...] = jnp.zeros_like(acc_ref)

    acc_ref[...] += jnp.dot(x_ref[...], w_ref[...],
                            preferred_element_type=jnp.float32)

    @pl.when(pl.program_id(2) == pl.num_programs(2) - 1)
    def _():
        y = acc_ref[...] + b_ref[...].astype(jnp.float32)   # broadcast [1, tn]
        o_ref[...] = jnp.maximum(y, 0.0).astype(o_ref.dtype)


# ---------------------------------------------------------------------------
# Wrapper
# ---------------------------------------------------------------------------

@functools.partial(jax.jit,
                   static_argnames=("tm", "tn", "tk", "use_bf16_mxu", "dropout_p"))
def lazy_linear_block(x, w, b, *, tm=None, tn=None, tk=None,
                      use_bf16_mxu=True, dropout_p=0.0):
    """y = dropout(relu(x @ w + b)).  Only dropout_p == 0.0 (eval) supported."""
    assert dropout_p == 0.0, "dropout p>0 not implemented in the Pallas kernel"
    # TODO(synk): implement training-mode dropout with pltpu.prng_* masking.

    orig_shape = x.shape
    K = orig_shape[-1]
    x2 = x.reshape(-1, K)
    M = x2.shape[0]
    Kw, N = w.shape
    assert Kw == K, f"weight K={Kw} does not match input K={K}"

    out_dtype = x.dtype

    # Cast once in the wrapper (not per-tile in the kernel). Skipped when the
    # caller already supplies bf16 operands (recommended for the hot path).
    # NOTE: bf16 MXU operands (f32 accumulation) is an explicit numerics
    # opt-in; pass use_bf16_mxu=False for full-f32 fidelity.
    if use_bf16_mxu:
        if x2.dtype != jnp.bfloat16:
            x2 = x2.astype(jnp.bfloat16)
        if w.dtype != jnp.bfloat16:
            w = w.astype(jnp.bfloat16)

    # --- Tile selection -----------------------------------------------------
    auto_mn = (tm is None) and (tn is None)
    tm = tm or _pick_tile(M, 8, 512)        # sublane-aligned
    tn = tn or _pick_tile(N, 128, 512)      # lane-dense output (mult of 128)
    tk = tk or _pick_tile(K, 128, 1024)     # multi-step tk is always >= 576

    Mp = _round_up(M, tm)
    Np = _round_up(N, tn)
    Kp = _round_up(K, tk)

    # Megacore (v7x has 2 TC/chip): make sure at least one "parallel" grid
    # axis has >= 2 blocks.  Near-free on single-TC v5e/v6e.
    if auto_mn and (Mp // tm) * (Np // tn) == 1:
        if Mp >= 16 and tm % 16 == 0:
            tm //= 2
        elif Np >= 256:
            cand = (Np // 2) // 128 * 128
            while cand >= 128 and Np % cand != 0:
                cand -= 128
            if cand >= 128:
                tn = cand

    # --- Padding (zero padding is exact for matmul + bias + ReLU) -----------
    if (Mp, Kp) != (M, K):
        x2 = jnp.pad(x2, ((0, Mp - M), (0, Kp - K)))
    wp = w if (Kp, Np) == (K, N) else jnp.pad(w, ((0, Kp - K), (0, Np - N)))
    b2 = b.reshape(1, N)
    if Np != N:
        b2 = jnp.pad(b2, ((0, 0), (0, Np - N)))

    x_sz = jnp.dtype(x2.dtype).itemsize
    w_sz = jnp.dtype(wp.dtype).itemsize
    b_sz = jnp.dtype(b2.dtype).itemsize
    o_sz = jnp.dtype(out_dtype).itemsize

    n_i, n_j, nk = Mp // tm, Np // tn, Kp // tk

    # Double-buffered inputs + output, bias, f32 accumulator.
    working_set = (2 * (tm * tk * x_sz + tk * tn * w_sz + tn * b_sz)
                   + 2 * tm * tn * o_sz + tm * tn * 4)
    vmem_limit = _vmem_limit_bytes(working_set)

    # bytes_accessed reflects re-streaming: x read n_j times, w read n_i times.
    cost = pl.CostEstimate(
        flops=2 * Mp * Np * Kp,
        transcendentals=0,
        bytes_accessed=(Mp * Kp * x_sz) * n_j + (Kp * Np * w_sz) * n_i
                       + Np * b_sz + Mp * Np * o_sz,
    )

    if nk == 1:
        grid_spec = pltpu.PrefetchScalarGridSpec(
            num_scalar_prefetch=0,
            grid=(n_i, n_j),
            in_specs=[
                pl.BlockSpec((tm, tk), lambda i, j: (i, 0)),
                pl.BlockSpec((tk, tn), lambda i, j: (0, j)),
                pl.BlockSpec((1, tn), lambda i, j: (0, j)),
            ],
            out_specs=pl.BlockSpec((tm, tn), lambda i, j: (i, j)),
        )
        kernel = _linear_relu_kernel_single_k
        dim_sem = ("parallel", "parallel")
    else:
        grid_spec = pltpu.PrefetchScalarGridSpec(
            num_scalar_prefetch=0,
            grid=(n_i, n_j, nk),
            in_specs=[
                pl.BlockSpec((tm, tk), lambda i, j, k: (i, k)),
                pl.BlockSpec((tk, tn), lambda i, j, k: (k, j)),
                pl.BlockSpec((1, tn), lambda i, j, k: (0, j)),
            ],
            out_specs=pl.BlockSpec((tm, tn), lambda i, j, k: (i, j)),
            scratch_shapes=[pltpu.VMEM((tm, tn), jnp.float32)],
        )
        kernel = _linear_relu_kernel_multi_k
        dim_sem = ("parallel", "parallel", "arbitrary")

    out = pl.pallas_call(
        kernel,
        out_shape=jax.ShapeDtypeStruct((Mp, Np), out_dtype),
        grid_spec=grid_spec,
        compiler_params=pltpu.CompilerParams(
            dimension_semantics=dim_sem,
            vmem_limit_bytes=vmem_limit,
        ),
        cost_estimate=cost,
    )(x2, wp, b2)

    out = out[:M, :N]
    return out.reshape(*orig_shape[:-1], N)


def _reference(x, w, b, use_bf16_mxu=True):
    if use_bf16_mxu:
        xm = x.astype(jnp.bfloat16)
        wm = w.astype(jnp.bfloat16)
    else:
        xm, wm = x, w
    y = jnp.einsum("...k,kn->...n", xm, wm, preferred_element_type=jnp.float32)
    y = y + b.astype(jnp.float32)
    return jnp.maximum(y, 0.0).astype(x.dtype)


if __name__ == "__main__":
    key = jax.random.PRNGKey(0)

    # ---- Test 1: module demo shape (single-K path, N padded 64 -> 128) ----
    kx, kw, kb = jax.random.split(key, 3)
    batch, in_features, out_features = 8, 32, 64
    bound = 1.0 / jnp.sqrt(in_features)
    w1 = jax.random.uniform(kw, (in_features, out_features), jnp.float32, -bound, bound)
    b1 = jax.random.uniform(kb, (out_features,), jnp.float32, -bound, bound)
    x1 = jax.random.normal(kx, (batch, in_features), jnp.float32)

    y1 = jax.block_until_ready(lazy_linear_block(x1, w1, b1))
    y1_ref = _reference(x1, w1, b1)
    assert y1.shape == (batch, out_features)
    assert jnp.allclose(y1, y1_ref, atol=2e-3, rtol=2e-3)

    # ---- Test 2: leading batch dims + multi-K path via default tiling ------
    # K=1152 -> nk=2, tk=640 (pads to 1280, not 2048): exercises the padding fix.
    k2x, k2w, k2b = jax.random.split(jax.random.PRNGKey(1), 3)
    in2, out2 = 1152, 384
    bound2 = 1.0 / jnp.sqrt(in2)
    w2 = jax.random.uniform(k2w, (in2, out2), jnp.float32, -bound2, bound2)
    b2 = jax.random.uniform(k2b, (out2,), jnp.float32, -bound2, bound2)
    x2 = jax.random.normal(k2x, (2, 8, in2), jnp.float32)

    y2 = jax.block_until_ready(lazy_linear_block(x2, w2, b2))
    y2_ref = _reference(x2, w2, b2)
    assert y2.shape == (2, 8, out2)
    assert jnp.allclose(y2, y2_ref, atol=2e-3, rtol=2e-3)

    # ---- Test 3: user-supplied small tk (many reduction steps) -------------
    y3 = jax.block_until_ready(lazy_linear_block(x2, w2, b2, tk=128))
    assert jnp.allclose(y3, y2_ref, atol=2e-3, rtol=2e-3)

    print("KERNEL_OK")
</pallas_src>

<mosaic_0001>
module attributes {stable_mosaic.version = 11 : i64} {
  func.func @_linear_relu_kernel_single_k(%arg0: i32, %arg1: i32, %arg2: memref<8x128xbf16, #tpu.memory_space<vmem>>, %arg3: memref<128x128xbf16, #tpu.memory_space<vmem>>, %arg4: memref<1x128xf32, #tpu.memory_space<vmem>>, %arg5: memref<8x128xf32, #tpu.memory_space<vmem>>) attributes {dimension_semantics = [#tpu.dimension_semantics<parallel>, #tpu.dimension_semantics<parallel>], iteration_bounds = array<i64: 1, 1>, scalar_prefetch = 0 : i64, scratch_operands = 0 : i64, tpu.core_type = #tpu.core_type<tc>, window_params = [{transform_indices = @transform_0, window_bounds = array<i64: 8, 128>}, {transform_indices = @transform_1, window_bounds = array<i64: 128, 128>}, {transform_indices = @transform_2, window_bounds = array<i64: 1, 128>}, {transform_indices = @transform_3, window_bounds = array<i64: 8, 128>}]} {
    %c0 = arith.constant 0 : index
    %c0_0 = arith.constant 0 : index
    %0 = vector.load %arg2[%c0, %c0_0] : memref<8x128xbf16, #tpu.memory_space<vmem>>, vector<8x128xbf16>
    %c0_1 = arith.constant 0 : index
    %c0_2 = arith.constant 0 : index
    %1 = vector.load %arg3[%c0_1, %c0_2] : memref<128x128xbf16, #tpu.memory_space<vmem>>, vector<128x128xbf16>
    %cst = arith.constant dense<0.000000e+00> : vector<8x128xf32>
    %2 = tpu.matmul %0, %1, %cst {dimension_numbers = #tpu.dot_dimension_numbers<[1], [0], [0], [1], [0, 0, 1, 1], [], []>} : vector<8x128xbf16>, vector<128x128xbf16>, vector<8x128xf32> -> vector<8x128xf32>
    %c0_3 = arith.constant 0 : index
    %c0_4 = arith.constant 0 : index
    %3 = vector.load %arg4[%c0_3, %c0_4] : memref<1x128xf32, #tpu.memory_space<vmem>>, vector<1x128xf32>
    %4 = vector.broadcast %3 : vector<1x128xf32> to vector<8x128xf32>
    %5 = arith.addf %2, %4 : vector<8x128xf32>
    %cst_5 = arith.constant 0.000000e+00 : f32
    %6 = vector.broadcast %cst_5 : f32 to vector<8x128xf32>
    %7 = arith.maximumf %5, %6 : vector<8x128xf32>
    %c0_6 = arith.constant 0 : index
    %c0_7 = arith.constant 0 : index
    %8 = vector.load %arg5[%c0_6, %c0_7] : memref<8x128xf32, #tpu.memory_space<vmem>>, vector<8x128xf32>
    tpu.vector_store %arg5[%c0_6, %c0_7], %7 {strides = array<i32>} : memref<8x128xf32, #tpu.memory_space<vmem>>, vector<8x128xf32>,
    return
  }
  func.func @transform_0(%arg0: i32, %arg1: i32) -> (i32, i32) {
    %c0_i32 = arith.constant 0 : i32
    %c0_i32_0 = arith.constant 0 : i32
    return %arg0, %c0_i32 : i32, i32
  }
  func.func @transform_1(%arg0: i32, %arg1: i32) -> (i32, i32) {
    %c0_i32 = arith.constant 0 : i32
    %c0_i32_0 = arith.constant 0 : i32
    return %c0_i32, %arg1 : i32, i32
  }
  func.func @transform_2(%arg0: i32, %arg1: i32) -> (i32, i32) {
    %c0_i32 = arith.constant 0 : i32
    %c0_i32_0 = arith.constant 0 : i32
    return %c0_i32, %arg1 : i32, i32
  }
  func.func @transform_3(%arg0: i32, %arg1: i32) -> (i32, i32) {
    %c0_i32 = arith.constant 0 : i32
    return %arg0, %arg1 : i32, i32
  }
}

</mosaic_0001>

<llo_original>
// kernel: lazy_linear_block.1
$region0: #{lazy_linear_block.1}
  #allocation0 [shape = 'u32[]', space=smem, size = 0x4, offset = 0x4, fixed_abs, tag = 'smem constant byte address 0x4 - core index']
  #allocation1 [shape = 'u32[72,128]{1,0:T(1,128)}', space=vmem, size = 0x9000, scoped, tag = 'internal scratch']
  %s0 = inlined_call_operand.vmem [shape: bf16[8,128], index: 0, kind: input, shape index: {}]
  %s1 = inlined_call_operand.vmem [shape: bf16[128,128], index: 1, kind: input, shape index: {}]
  %s2 = inlined_call_operand.vmem [shape: f32[1,128], index: 2, kind: input, shape index: {}]
  %s3 = inlined_call_operand.hbm [shape: f32[8,128], index: 3, kind: output, shape index: {}]
  %s4 = sld [smem:[#allocation0]]
  $region22: #{lazy_linear_block.1} parent=0
    _
  %s6 = ssub.s32 1, %s4
  %s7 = scalar_select 0, %s6, %s4
  $region1: #{lazy_linear_block.1} parent=0
    #allocation2 [shape = 'u8[4096]{0}', space=vmem, size = 0x1000, scoped, tag = 'output window, operand 0, single buffered']
    #allocation3 [shape = 's32[1]{0}', space=sflag, size = 0x4, scoped, tag = 'scoped memory for lazy_linear_block.1']
    %8 = vsyncpa [#allocation3], 0
    // Predicated region
    $region2: #{lazy_linear_block.1} parent=1 // pred_check
      _
    $region3: #{lazy_linear_block.1} parent=1 // pred_check_branch
      %10 = sbr.rel (0) target = $region5
    $region4: #{lazy_linear_block.1} parent=1 // pred_region
      _
    $region5: #{lazy_linear_block.1} parent=1 // pred_fallthru
      _
    // Predicated region
    $region6: #{lazy_linear_block.1} parent=1 // pred_check
      _
    $region7: #{lazy_linear_block.1} parent=1 // pred_check_branch
      %12 = sbr.rel (0) target = $region9
    $region8: #{lazy_linear_block.1} parent=1 // pred_region
      _
    $region9: #{lazy_linear_block.1} parent=1 // pred_fallthru
      _
    // Predicated region
    $region10: #{lazy_linear_block.1} parent=1 // pred_check
      _
    $region11: #{lazy_linear_block.1} parent=1 // pred_check_branch
      %14 = sbr.rel (0) target = $region13
    $region12: #{lazy_linear_block.1} parent=1 // pred_region
      _
    $region13: #{lazy_linear_block.1} parent=1 // pred_fallthru
      _
    %v15 = vld [vmem:[%s0] sm:$0xf]
    %v16 = vld [vmem:[%s1] sm:$0xf]
    %v17 = vld [vmem:[%s1 + $0x4] sm:$0xf]
    %v18 = vld [vmem:[%s1 + $0x8] sm:$0xf]
    %v19 = vld [vmem:[%s1 + $0xc] sm:$0xf]
    %v20 = vld [vmem:[%s1 + $0x10] sm:$0xf]
    %v21 = vld [vmem:[%s1 + $0x14] sm:$0xf]
    %v22 = vld [vmem:[%s1 + $0x18] sm:$0xf]
    %v23 = vld [vmem:[%s1 + $0x1c] sm:$0xf]
    %v24 = vld [vmem:[%s1 + $0x20] sm:$0xf]
    %v25 = vld [vmem:[%s1 + $0x24] sm:$0xf]
    %v26 = vld [vmem:[%s1 + $0x28] sm:$0xf]
    %v27 = vld [vmem:[%s1 + $0x2c] sm:$0xf]
    %v28 = vld [vmem:[%s1 + $0x30] sm:$0xf]
    %v29 = vld [vmem:[%s1 + $0x34] sm:$0xf]
    %v30 = vld [vmem:[%s1 + $0x38] sm:$0xf]
    %v31 = vld [vmem:[%s1 + $0x3c] sm:$0xf]
    %v32 = vld [vmem:[%s2] sm:$0x1]
    %v34 = vperm.slane %v32, 0
    %v52 = vunpack.c.l.b16 %v16
    %v53 = vunpack.c.l.b16 %v17
    %v54 = vunpack.c.l.b16 %v18
    %v55 = vunpack.c.l.b16 %v19
    %v56 = vunpack.c.l.b16 %v20
    %v57 = vunpack.c.l.b16 %v21
    %v58 = vunpack.c.l.b16 %v22
    %v59 = vunpack.c.l.b16 %v23
    %v60 = vunpack.c.l.b16 %v24
    %v61 = vunpack.c.l.b16 %v25
    %v62 = vunpack.c.l.b16 %v26
    %v63 = vunpack.c.l.b16 %v27
    %v64 = vunpack.c.l.b16 %v28
    %v65 = vunpack.c.l.b16 %v29
    %v66 = vunpack.c.l.b16 %v30
    %v67 = vunpack.c.l.b16 %v31
    %v68 = vpack.c.b16 %v53, %v52
    %v69 = vpack.c.b16 %v55, %v54
    %v70 = vpack.c.b16 %v57, %v56
    %v71 = vpack.c.b16 %v59, %v58
    %v72 = vpack.c.b16 %v61, %v60
    %v73 = vpack.c.b16 %v63, %v62
    %v74 = vpack.c.b16 %v65, %v64
    %v75 = vpack.c.b16 %v67, %v66
    %84 = vmatpush.bf16.msra.mxu0 %v75
    %85 = vmatpush.bf16.msra.mxu0 %v74
    %86 = vmatpush.bf16.msra.mxu0 %v73
    %87 = vmatpush.bf16.msra.mxu0 %v72
    %88 = vmatpush.bf16.msra.mxu0 %v71
    %89 = vmatpush.bf16.msra.mxu0 %v70
    %90 = vmatpush.bf16.msra.mxu0 %v69
    %91 = vmatpush.bf16.msra.mxu0 %v68
    %92 = vmatmul.bf16.gmra.mxu0 %v15
    %v93 = vpop.f32.mrf.mxu0
    %v94 = vadd.f32 %v34, %v93
    %v95 = vpop.f32.mrf.mxu0
    %96 = vdwg.mxu0
    %v97 = vmax.f32 %v94, 0.0
    %98 = vst [vmem:[#allocation2] sm:$0xff] %v97
    // Predicated region
    $region14: #{lazy_linear_block.1} parent=1 // pred_check
      _
    $region15: #{lazy_linear_block.1} parent=1 // pred_check_branch
      %100 = sbr.rel (0) target = $region17
    $region16: #{lazy_linear_block.1} parent=1 // pred_region
      %102 = vsyncadd [#allocation3], 0
      %s104 = sshll.u32 [#allocation2], 4
      %s105 = int_to_ptr.vmem [resolvable:$true] %s104
      %s106 = sshll.u32 %s3, 4
      %s107 = int_to_ptr.hbm [resolvable:$true] %s106
      %109 = dma.vmem_to_hbm [thread:$0]  %s105, 128, %s107, [#allocation3]
    $region17: #{lazy_linear_block.1} parent=1 // pred_fallthru
      _
    // Predicated region
    $region18: #{lazy_linear_block.1} parent=1 // pred_check
      _
    $region19: #{lazy_linear_block.1} parent=1 // pred_check_branch
      %111 = sbr.rel (0) target = $region21
    $region20: #{lazy_linear_block.1} parent=1 // pred_region
      %113 = dma.done [#allocation3], 128
    $region21: #{lazy_linear_block.1} parent=1 // pred_fallthru
      _
    %114 = vsyncpa [#allocation3], 1

</llo_original>
